<compile_context>
chip_gen: v7x
topology: tpu7x:2x2x1
jax: 0.10.0
libtpu: 0.0.40
codegen_flags: <defaults>
</compile_context>

<pallas_src>
import jax
import jax.numpy as jnp
from jax.experimental import pallas as pl
from jax.experimental.pallas import tpu as pltpu

_SLAB_WIDTH = 512      # lane-dense last dim (multiple of 128 -> unmasked vst)
_MAX_TILE_ROWS = 2048  # 2048 x 512 f32 = 4 MiB per tile (2 MiB for bf16)


def _toy_kernel(theta_ref, x_ref, o_ref):
    # theta_ref: SMEM (2,) f32 holding [theta1, theta2]
    theta1 = theta_ref[0]
    theta2 = theta_ref[1]
    x = x_ref[...].astype(jnp.float32)
    # -theta1*x^2 + theta2*x  ==  x * (theta2 - theta1*x)   (fewer VALU ops)
    o_ref[...] = (x * (theta2 - theta1 * x)).astype(o_ref.dtype)


def _choose_tile_rows(rows, sublane):
    """Pick a tile height: big (amortize per-step overhead) but >= 2 grid steps."""
    if rows <= sublane:
        return rows                     # single full-extent block
    half = max(sublane, (rows // 2) // sublane * sublane)
    return min(_MAX_TILE_ROWS, half)


def _run_pallas(x2d, thetas, out_dtype):
    rows = x2d.shape[0]
    itemsize = jnp.dtype(out_dtype).itemsize
    packing = max(1, 4 // itemsize)     # f32 -> 1, bf16 -> 2, int8/fp8 -> 4
    sublane = 8 * packing
    tile_rows = _choose_tile_rows(rows, sublane)
    grid = (pl.cdiv(rows, tile_rows),)  # partial last block is masked by Pallas

    n_elems = rows * _SLAB_WIDTH
    cost = pl.CostEstimate(
        flops=2 * n_elems, transcendentals=0, bytes_accessed=2 * n_elems * itemsize
    )

    return pl.pallas_call(
        _toy_kernel,
        out_shape=jax.ShapeDtypeStruct((rows, _SLAB_WIDTH), out_dtype),
        grid=grid,
        in_specs=[
            pl.BlockSpec(memory_space=pltpu.SMEM),                  # [theta1, theta2]
            pl.BlockSpec((tile_rows, _SLAB_WIDTH), lambda i: (i, 0)),
        ],
        out_specs=pl.BlockSpec((tile_rows, _SLAB_WIDTH), lambda i: (i, 0)),
        compiler_params=pltpu.CompilerParams(
            dimension_semantics=("parallel",),   # shard row-tiles across TCs (v7x)
            vmem_limit_bytes=40 << 20,           # safe on v5e 16MiB default / v7x 64MiB phys
        ),
        cost_estimate=cost,
    )(thetas, x2d)


def toy_model_forward(x, theta1, theta2):
    """Computes -theta1 * x**2 + theta2 * x via a tiled Pallas TPU kernel."""
    orig_shape = x.shape
    dtype = x.dtype

    thetas = jnp.stack(
        [jnp.asarray(theta1, jnp.float32), jnp.asarray(theta2, jnp.float32)]
    )

    xf = jnp.ravel(x)                    # free reshape for contiguous arrays
    n = xf.shape[0]
    n_main = (n // _SLAB_WIDTH) * _SLAB_WIDTH

    if n_main == n and n > 0:
        # Fully aligned: zero-copy path (reshape in, reshape out).
        out2d = _run_pallas(xf.reshape(-1, _SLAB_WIDTH), thetas, dtype)
        return out2d.reshape(orig_shape)

    # Ragged tail (< 512 elems): compute it with plain jnp to avoid a wrapper-side
    # pad + slice over the full array (each would cost an extra HBM pass).
    def _jnp_formula(v):
        v32 = v.astype(jnp.float32)
        return (v32 * (thetas[1] - thetas[0] * v32)).astype(dtype)

    if n_main == 0:
        return _jnp_formula(xf).reshape(orig_shape)

    out_main = _run_pallas(xf[:n_main].reshape(-1, _SLAB_WIDTH), thetas, dtype)
    out_tail = _jnp_formula(xf[n_main:])
    return jnp.concatenate([out_main.reshape(-1), out_tail]).reshape(orig_shape)


if __name__ == "__main__":
    # Deterministic parameter init (matches nn.Parameter values in __init__).
    theta1 = jnp.float32(0.5)
    theta2 = jnp.float32(-0.5)

    key = jax.random.PRNGKey(0)
    k0, k1, k2, k3 = jax.random.split(key, 4)

    # Small input consistent with the module (elementwise, any shape works).
    x_small = jax.random.normal(k0, (2, 4, 16, 16), dtype=jnp.float32)
    # Multi-tile grid path (>= 2 grid steps).
    x_big = jax.random.normal(k1, (1024, 512), dtype=jnp.float32)
    # bf16 path: original dtype kept in HBM, f32 math in-register.
    x_bf16 = jax.random.normal(k2, (256, 512), dtype=jnp.bfloat16)
    # Ragged path: main slab via Pallas, <512-elem tail via jnp.
    x_ragged = jax.random.normal(k3, (1000,), dtype=jnp.float32)

    ok = True
    for x, atol, rtol in (
        (x_small, 1e-6, 1e-6),
        (x_big, 1e-6, 1e-6),
        (x_bf16, 2e-2, 2e-2),
        (x_ragged, 1e-6, 1e-6),
    ):
        out = jax.block_until_ready(toy_model_forward(x, theta1, theta2))
        x32 = x.astype(jnp.float32)
        ref = (-theta1 * x32 ** 2 + theta2 * x32).astype(x.dtype)
        ok &= bool(
            jnp.allclose(
                out.astype(jnp.float32), ref.astype(jnp.float32), atol=atol, rtol=rtol
            )
        )

    assert ok, "mismatch vs reference"
    print("KERNEL_OK")
</pallas_src>

<mosaic_0001>
module attributes {stable_mosaic.version = 11 : i64} {
  func.func @_toy_kernel(%arg0: i32, %arg1: memref<2xf32, #tpu.memory_space<smem>>, %arg2: memref<4x512xf32, #tpu.memory_space<vmem>>, %arg3: memref<4x512xf32, #tpu.memory_space<vmem>>) attributes {dimension_semantics = [#tpu.dimension_semantics<parallel>], iteration_bounds = array<i64: 1>, scalar_prefetch = 0 : i64, scratch_operands = 0 : i64, tpu.core_type = #tpu.core_type<tc>, window_params = [{transform_indices = @transform_0, window_bounds = array<i64: 2>}, {transform_indices = @transform_1, window_bounds = array<i64: 4, 512>}, {transform_indices = @transform_2, window_bounds = array<i64: 4, 512>}]} {
    %c0 = arith.constant 0 : index
    %0 = memref.load %arg1[%c0] : memref<2xf32, #tpu.memory_space<smem>>
    %c1 = arith.constant 1 : index
    %1 = memref.load %arg1[%c1] : memref<2xf32, #tpu.memory_space<smem>>
    %c0_0 = arith.constant 0 : index
    %c0_1 = arith.constant 0 : index
    %2 = vector.load %arg2[%c0_0, %c0_1] : memref<4x512xf32, #tpu.memory_space<vmem>>, vector<4x512xf32>
    %3 = vector.broadcast %0 : f32 to vector<4x512xf32>
    %4 = arith.mulf %3, %2 : vector<4x512xf32>
    %5 = vector.broadcast %1 : f32 to vector<4x512xf32>
    %6 = arith.subf %5, %4 : vector<4x512xf32>
    %7 = arith.mulf %2, %6 : vector<4x512xf32>
    %c0_2 = arith.constant 0 : index
    %c0_3 = arith.constant 0 : index
    %8 = vector.load %arg3[%c0_2, %c0_3] : memref<4x512xf32, #tpu.memory_space<vmem>>, vector<4x512xf32>
    tpu.vector_store %arg3[%c0_2, %c0_3], %7 {strides = array<i32>} : memref<4x512xf32, #tpu.memory_space<vmem>>, vector<4x512xf32>,
    return
  }
  func.func @transform_0(%arg0: i32) -> i32 {
    %c0_i32 = arith.constant 0 : i32
    %c0_i32_0 = arith.constant 0 : i32
    return %c0_i32 : i32
  }
  func.func @transform_1(%arg0: i32) -> (i32, i32) {
    %c0_i32 = arith.constant 0 : i32
    %c0_i32_0 = arith.constant 0 : i32
    return %arg0, %c0_i32 : i32, i32
  }
  func.func @transform_2(%arg0: i32) -> (i32, i32) {
    %c0_i32 = arith.constant 0 : i32
    %c0_i32_0 = arith.constant 0 : i32
    return %arg0, %c0_i32 : i32, i32
  }
}

</mosaic_0001>

<llo_original>
// kernel: tpu_custom_call.1
$region0: #{tpu_custom_call.1}
  #allocation0 [shape = 'u32[]', space=smem, size = 0x4, offset = 0x4, fixed_abs, tag = 'smem constant byte address 0x4 - core index']
  #allocation1 [shape = 'u32[144,128]{1,0:T(1,128)}', space=vmem, size = 0x12000, scoped, tag = 'internal scratch']
  %s0 = inlined_call_operand.hbm [shape: f32[2], index: 0, kind: input, shape index: {}]
  %s1 = inlined_call_operand.hbm [shape: f32[4,512], index: 1, kind: input, shape index: {}]
  %s2 = inlined_call_operand.hbm [shape: f32[4,512], index: 2, kind: output, shape index: {}]
  %s3 = sld [smem:[#allocation0]]
  $region26: #{tpu_custom_call.1} parent=0
    _
  %s5 = ssub.s32 1, %s3
  %s6 = scalar_select 0, %s5, %s3
  $region1: #{tpu_custom_call.1} parent=0
    #allocation2 [shape = 'u8[512]{0}', space=smem, size = 0x200, scoped, tag = 'input window, operand 0, single buffered']
    #allocation3 [shape = 's32[1]{0}', space=sflag, size = 0x4, scoped, tag = 'scoped memory for tpu_custom_call.1']
    #allocation4 [shape = 's32[1]{0}', space=sflag, size = 0x4, scoped, tag = 'scoped memory for tpu_custom_call.1']
    #allocation5 [shape = 's32[1]{0}', space=sflag, size = 0x4, scoped, tag = 'scoped memory for tpu_custom_call.1']
    #allocation6 [shape = 'u8[8192]{0}', space=vmem, size = 0x2000, scoped, tag = 'input window, operand 1, single buffered']
    #allocation7 [shape = 'u8[8192]{0}', space=vmem, size = 0x2000, scoped, tag = 'output window, operand 0, single buffered']
    %7 = vsyncpa [#allocation5], 0
    %8 = vsyncpa [#allocation3], 0
    %9 = vsyncpa [#allocation4], 0
    // Predicated region
    $region2: #{tpu_custom_call.1} parent=1 // pred_check
      _
    $region3: #{tpu_custom_call.1} parent=1 // pred_check_branch
      %11 = sbr.rel (0) target = $region5
    $region4: #{tpu_custom_call.1} parent=1 // pred_region
      %s13 = ssub.s32 16, 16
      %14 = vsyncadd [#allocation5], %s13
      %17 = dma.hbm_to_smem %s0, 16, [#allocation2], [#allocation5]
    $region5: #{tpu_custom_call.1} parent=1 // pred_fallthru
      _
    // Predicated region
    $region6: #{tpu_custom_call.1} parent=1 // pred_check
      _
    $region7: #{tpu_custom_call.1} parent=1 // pred_check_branch
      %19 = sbr.rel (0) target = $region9
    $region8: #{tpu_custom_call.1} parent=1 // pred_region
      %s21 = ssub.s32 256, 256
      %22 = vsyncadd [#allocation3], %s21
      %s24 = sshll.u32 [#allocation6], 4
      %s25 = int_to_ptr.vmem [resolvable:$true] %s24
      %27 = dma.hbm_to_vmem [thread:$0]  %s1, 256, %s25, [#allocation3]
    $region9: #{tpu_custom_call.1} parent=1 // pred_fallthru
      _
    // Predicated region
    $region10: #{tpu_custom_call.1} parent=1 // pred_check
      _
    $region11: #{tpu_custom_call.1} parent=1 // pred_check_branch
      %29 = sbr.rel (0) target = $region13
    $region12: #{tpu_custom_call.1} parent=1 // pred_region
      %30 = dma.done [#allocation5], 16
    $region13: #{tpu_custom_call.1} parent=1 // pred_fallthru
      _
    // Predicated region
    $region14: #{tpu_custom_call.1} parent=1 // pred_check
      _
    $region15: #{tpu_custom_call.1} parent=1 // pred_check_branch
      %32 = sbr.rel (0) target = $region17
    $region16: #{tpu_custom_call.1} parent=1 // pred_region
      %33 = dma.done [#allocation3], 256
    $region17: #{tpu_custom_call.1} parent=1 // pred_fallthru
      _
    %34 = sfence
    %s35 = sld [smem:[#allocation2]]
    %s36 = sld [smem:[#allocation2 + $0x1]]
    %v37 = vld [vmem:[#allocation6] sm:$0xff]
    %v38 = vld [vmem:[#allocation6 + $0x8] sm:$0xff]
    %v39 = vstv %s35
    %v40 = vmul.f32 %v39, %v37
    %v41 = vmul.f32 %v39, %v38
    %v42 = vstv %s36
    %v43 = vsub.f32 %v42, %v40
    %v44 = vsub.f32 %v42, %v41
    %v45 = vmul.f32 %v37, %v43
    %v46 = vmul.f32 %v38, %v44
    %47 = vst [vmem:[#allocation7] sm:$0xff] %v45
    %48 = vst [vmem:[#allocation7 + $0x8] sm:$0xff] %v46
    // Predicated region
    $region18: #{tpu_custom_call.1} parent=1 // pred_check
      _
    $region19: #{tpu_custom_call.1} parent=1 // pred_check_branch
      %50 = sbr.rel (0) target = $region21
    $region20: #{tpu_custom_call.1} parent=1 // pred_region
      %s52 = ssub.s32 256, 256
      %53 = vsyncadd [#allocation4], %s52
      %s55 = sshll.u32 [#allocation7], 4
      %s56 = int_to_ptr.vmem [resolvable:$true] %s55
      %58 = dma.vmem_to_hbm [thread:$0]  %s56, 256, %s2, [#allocation4]
    $region21: #{tpu_custom_call.1} parent=1 // pred_fallthru
      _
    // Predicated region
    $region22: #{tpu_custom_call.1} parent=1 // pred_check
      _
    $region23: #{tpu_custom_call.1} parent=1 // pred_check_branch
      %60 = sbr.rel (0) target = $region25
    $region24: #{tpu_custom_call.1} parent=1 // pred_region
      %61 = dma.done [#allocation4], 256
    $region25: #{tpu_custom_call.1} parent=1 // pred_fallthru
      _
    %62 = vsyncpa [#allocation3], 1
    %63 = vsyncpa [#allocation4], 1
    %64 = vsyncpa [#allocation5], 1

</llo_original>
